<compile_context>
chip_gen: v6e
topology: v6e:2x2x1
jax: 0.10.0
libtpu: 0.0.40
codegen_flags: <defaults>
</compile_context>

<pallas_src>
import jax
import jax.numpy as jnp
from jax.experimental import pallas as pl
from jax.experimental.pallas import tpu as pltpu


def _round_up(n, m):
    return ((n + m - 1) // m) * m


def pwca_kernel(z_ref, x_ref, a_ref, out_ref):
    """One grid step.

    z_ref:   (BC, C,  Nz)  template features (un-transposed; MXU eats t-LHS natively)
    x_ref:   (BC, C,  TX)  lane-dense search-feature tile (TX % 128 == 0)
    a_ref:   (BC, Nz, 1)   precomputed channel-attention gates
    out_ref: (BC, Nz, TX)  gated correlation tile
    """
    # Batched matmul over the folded batch chunk, contracting the channel axis
    # of both operands:  (BC, Nz, TX) = einsum('bcz,bcx->bzx', z, x).
    corr = jnp.einsum(
        'bcz,bcx->bzx', z_ref[...], x_ref[...],
        preferred_element_type=jnp.float32)
    out_ref[...] = (corr * a_ref[...]).astype(out_ref.dtype)


def pwca_forward(z, x, w1, b1, w2, b2):
    """PWCA forward. z: (B, C, Hz, Wz), x: (B, C, Hx, Wx) -> (B, Hz*Wz, Hx, Wx)."""
    B, C, Hz, Wz = z.shape
    _, _, Hx, Wx = x.shape
    Nz, Nx = Hz * Wz, Hx * Wx

    z_mat = z.reshape(B, C, Nz)            # no transpose; kernel contracts C directly
    x_mat = x.reshape(B, C, Nx)

    # --- channel attention, hoisted out of the hot kernel via linearity of the
    #     mean.  Differs from the reference only by fp reassociation.
    x_mean = jnp.mean(x_mat, axis=2)                              # (B, C)
    pooled = jnp.einsum('bcz,bc->bz', z_mat, x_mean)              # (B, Nz) == mean_nx(corr)
    h = jnp.maximum(pooled @ w1.T + b1, 0.0)                      # fc1 (1x1 conv) + relu
    att = jax.nn.sigmoid(h @ w2.T + b2)                           # fc2 (1x1 conv) + sigmoid
    att = att[:, :, None].astype(jnp.float32)                     # (B, Nz, 1)

    # --- lane-dense spatial tiling: pad Nx to a multiple of 128, pick TX.
    nx128 = _round_up(Nx, 128)
    if nx128 % 512 == 0:
        TX = 512
    elif nx128 % 256 == 0:
        TX = 256
    else:
        TX = 128
    TX = min(TX, nx128)
    Nxp = nx128
    if Nxp != Nx:
        x_mat = jnp.pad(x_mat, ((0, 0), (0, 0), (0, Nxp - Nx)))
    n_nx = Nxp // TX

    # --- batch folding: few, fat grid steps; keep >= 2 parallel steps when
    #     possible so v7x's two TensorCores both get work (v5e/v6e unaffected).
    if n_nx >= 2 or B == 1:
        BC = B
    elif B % 2 == 0:
        BC = B // 2
    else:
        BC = 1
    nb = B // BC

    # TODO(synk): z/x could be cast to bf16 for the corr matmul (MXU-native on all
    # generations) if downstream tolerates ~bf16 output precision; kept fp32 here.
    out = pl.pallas_call(
        pwca_kernel,
        out_shape=jax.ShapeDtypeStruct((B, Nz, Nxp), jnp.float32),
        grid_spec=pltpu.PrefetchScalarGridSpec(
            num_scalar_prefetch=0,
            grid=(nb, n_nx),
            in_specs=[
                pl.BlockSpec((BC, C, Nz), lambda i, j: (i, 0, 0)),   # z_mat (DMA skipped over j)
                pl.BlockSpec((BC, C, TX), lambda i, j: (i, 0, j)),   # x_mat tile
                pl.BlockSpec((BC, Nz, 1), lambda i, j: (i, 0, 0)),   # attention gates
            ],
            out_specs=pl.BlockSpec((BC, Nz, TX), lambda i, j: (i, 0, j)),
        ),
        compiler_params=pltpu.CompilerParams(
            dimension_semantics=("parallel", "parallel")),
    )(z_mat, x_mat, att)

    if Nxp != Nx:
        out = out[:, :, :Nx]
    return out.reshape(B, Nz, Hx, Wx)


def pwca_reference(z, x, w1, b1, w2, b2):
    """Pure-JAX reference of PWCA forward (matches the PyTorch module)."""
    B, C, Hz, Wz = z.shape
    _, _, Hx, Wx = x.shape
    Nz, Nx = Hz * Wz, Hx * Wx
    z_mat = jnp.transpose(z.reshape(B, C, Nz), (0, 2, 1))
    x_mat = x.reshape(B, C, Nx)
    corr = jnp.matmul(z_mat, x_mat)                       # (B, Nz, Nx)
    pooled = jnp.mean(corr, axis=2)                       # (B, Nz)  AdaptiveAvgPool2d(1)
    h = jnp.maximum(pooled @ w1.T + b1, 0.0)
    a = jax.nn.sigmoid(h @ w2.T + b2)                     # (B, Nz)
    out = corr * a[:, :, None]
    return out.reshape(B, Nz, Hx, Wx)


if __name__ == "__main__":
    key = jax.random.PRNGKey(0)
    k_z, k_x, k_w1, k_b1, k_w2, k_b2 = jax.random.split(key, 6)

    # Small shapes: template z is 4x4 -> num_channel = Hz*Wz = 16
    B, C = 2, 16
    Hz = Wz = 4
    Hx = Wx = 8
    Nz = Hz * Wz   # == num_channel of the CA module

    z = jax.random.normal(k_z, (B, C, Hz, Wz), dtype=jnp.float32)
    x = jax.random.normal(k_x, (B, C, Hx, Wx), dtype=jnp.float32)

    # CAModule params (reduction=1): fc1/fc2 are 1x1 convs with C_in = C_out = Nz
    w1 = jax.random.normal(k_w1, (Nz, Nz), dtype=jnp.float32) * 0.1
    b1 = jax.random.normal(k_b1, (Nz,), dtype=jnp.float32) * 0.1
    w2 = jax.random.normal(k_w2, (Nz, Nz), dtype=jnp.float32) * 0.1
    b2 = jax.random.normal(k_b2, (Nz,), dtype=jnp.float32) * 0.1

    out = pwca_forward(z, x, w1, b1, w2, b2)
    out = jax.block_until_ready(out)

    ref = pwca_reference(z, x, w1, b1, w2, b2)
    assert out.shape == (B, Nz, Hx, Wx)
    assert jnp.allclose(out, ref, atol=1e-4, rtol=1e-4)

    print("KERNEL_OK")
</pallas_src>

<mosaic_0001>
module attributes {stable_mosaic.version = 11 : i64} {
  func.func @pwca_kernel(%arg0: i32, %arg1: i32, %arg2: memref<1x16x16xf32, #tpu.memory_space<vmem>>, %arg3: memref<1x16x128xf32, #tpu.memory_space<vmem>>, %arg4: memref<1x16x1xf32, #tpu.memory_space<vmem>>, %arg5: memref<1x16x128xf32, #tpu.memory_space<vmem>>) attributes {dimension_semantics = [#tpu.dimension_semantics<parallel>, #tpu.dimension_semantics<parallel>], iteration_bounds = array<i64: 2, 1>, scalar_prefetch = 0 : i64, scratch_operands = 0 : i64, tpu.core_type = #tpu.core_type<tc>, window_params = [{transform_indices = @transform_0, window_bounds = array<i64: 1, 16, 16>}, {transform_indices = @transform_1, window_bounds = array<i64: 1, 16, 128>}, {transform_indices = @transform_2, window_bounds = array<i64: 1, 16, 1>}, {transform_indices = @transform_3, window_bounds = array<i64: 1, 16, 128>}]} {
    %c0 = arith.constant 0 : index
    %c0_0 = arith.constant 0 : index
    %c0_1 = arith.constant 0 : index
    %0 = vector.load %arg2[%c0, %c0_0, %c0_1] : memref<1x16x16xf32, #tpu.memory_space<vmem>>, vector<1x16x16xf32>
    %c0_2 = arith.constant 0 : index
    %c0_3 = arith.constant 0 : index
    %c0_4 = arith.constant 0 : index
    %1 = vector.load %arg3[%c0_2, %c0_3, %c0_4] : memref<1x16x128xf32, #tpu.memory_space<vmem>>, vector<1x16x128xf32>
    "tpu.trace_start"() <{level = 10 : i32, message = "bcz,bcx->bzx"}> : () -> ()
    %cst = arith.constant dense<0.000000e+00> : vector<1x16x128xf32>
    %2 = tpu.matmul %0, %1, %cst {dimension_numbers = #tpu.dot_dimension_numbers<[1], [1], [2], [2], [0, 0, 0, 2, 1, 2], [0], [0]>} : vector<1x16x16xf32>, vector<1x16x128xf32>, vector<1x16x128xf32> -> vector<1x16x128xf32>
    "tpu.trace_stop"() : () -> ()
    %c0_5 = arith.constant 0 : index
    %c0_6 = arith.constant 0 : index
    %c0_7 = arith.constant 0 : index
    %3 = vector.load %arg4[%c0_5, %c0_6, %c0_7] : memref<1x16x1xf32, #tpu.memory_space<vmem>>, vector<1x16x1xf32>
    %4 = vector.broadcast %3 : vector<1x16x1xf32> to vector<1x16x128xf32>
    %5 = arith.mulf %2, %4 : vector<1x16x128xf32>
    %c0_8 = arith.constant 0 : index
    %c0_9 = arith.constant 0 : index
    %c0_10 = arith.constant 0 : index
    %6 = vector.load %arg5[%c0_8, %c0_9, %c0_10] : memref<1x16x128xf32, #tpu.memory_space<vmem>>, vector<1x16x128xf32>
    tpu.vector_store %arg5[%c0_8, %c0_9, %c0_10], %5 {strides = array<i32>} : memref<1x16x128xf32, #tpu.memory_space<vmem>>, vector<1x16x128xf32>,
    return
  }
  func.func @transform_0(%arg0: i32, %arg1: i32) -> (i32, i32, i32) {
    %c0_i32 = arith.constant 0 : i32
    %c0_i32_0 = arith.constant 0 : i32
    %c0_i32_1 = arith.constant 0 : i32
    return %arg0, %c0_i32, %c0_i32_0 : i32, i32, i32
  }
  func.func @transform_1(%arg0: i32, %arg1: i32) -> (i32, i32, i32) {
    %c0_i32 = arith.constant 0 : i32
    %c0_i32_0 = arith.constant 0 : i32
    return %arg0, %c0_i32, %arg1 : i32, i32, i32
  }
  func.func @transform_2(%arg0: i32, %arg1: i32) -> (i32, i32, i32) {
    %c0_i32 = arith.constant 0 : i32
    %c0_i32_0 = arith.constant 0 : i32
    %c0_i32_1 = arith.constant 0 : i32
    return %arg0, %c0_i32, %c0_i32_0 : i32, i32, i32
  }
  func.func @transform_3(%arg0: i32, %arg1: i32) -> (i32, i32, i32) {
    %c0_i32 = arith.constant 0 : i32
    %c0_i32_0 = arith.constant 0 : i32
    return %arg0, %c0_i32, %arg1 : i32, i32, i32
  }
}

</mosaic_0001>

<llo_original>
// kernel: tpu_custom_call.1
$region0: #{tpu_custom_call.1}
  #allocation0 [shape = 'u32[]', space=smem, size = 0x4, offset = 0x4, fixed_abs, tag = 'smem constant byte address 0x4 - core index']
  #allocation1 [shape = 'u32[144,128]{1,0:T(1,128)}', space=vmem, size = 0x12000, scoped, tag = 'internal scratch']
  %s0 = inlined_call_operand.vmem [shape: f32[2,16,16], index: 0, kind: input, shape index: {}]
  %s1 = inlined_call_operand.hbm [shape: f32[2,16,128], index: 1, kind: input, shape index: {}]
  %s2 = inlined_call_operand.vmem [shape: f32[2,16,1], index: 2, kind: input, shape index: {}]
  %s3 = inlined_call_operand.hbm [shape: f32[2,16,128], index: 3, kind: output, shape index: {}]
  %s4 = sld [smem:[#allocation0]]
  $region49: #{tpu_custom_call.1} parent=0
    _
  %s6 = ssub.s32 1, %s4
  %s7 = scalar_select 0, %s6, %s4
  $region1: #{tpu_custom_call.1} parent=0
    #allocation2 [shape = 'u8[16384]{0}', space=vmem, size = 0x4000, scoped, tag = 'input window, operand 1']
    #allocation3 [shape = 's32[2]{0}', space=sflag, size = 0x8, scoped, tag = 'scoped memory for tpu_custom_call.1']
    #allocation4 [shape = 's32[2]{0}', space=sflag, size = 0x8, scoped, tag = 'scoped memory for tpu_custom_call.1']
    #allocation5 [shape = 'u8[16384]{0}', space=vmem, size = 0x4000, scoped, tag = 'output window, operand 0']
    %8 = vsyncpa [#allocation3], 0
    %s9 = scalar_lea.sflag [#allocation3], 1
    %10 = vsyncpa %s9, 0
    %11 = vsyncpa [#allocation4], 0
    %s12 = scalar_lea.sflag [#allocation4], 1
    %13 = vsyncpa %s12, 0
    loop: start=0, step=1, limit=4
    $region2: #{tpu_custom_call.1} parent=1 // loop_pre_header
      _
    $region3: #{tpu_custom_call.1} parent=1 // loop_header
      %s15 = sphi 0, %s19
      %p16 = scmp.ge.s32.totalorder %s15, 4
      %s22 = sphi 0, %s34
      %s23 = sphi 0, %s30
      %s24 = sphi 0, %s22
      %s25 = sphi 0, %s23
      %s26 = sphi 0, %s24
      %s27 = sphi 0, %s25
      %s37 = sphi 0, %s39
      %s40 = sphi 0, %s37
      %s41 = sphi 0, %s40
      %s57 = sphi 0, %s41
      %s65 = sphi 0, %s67
      %s68 = sphi 0, %s65
      %s69 = sphi 0, %s68
      %s85 = sphi 0, %s69
      %s91 = sphi 0, %s93
      %s94 = sphi 0, %s91
      %s95 = sphi 0, %s94
      %s111 = sphi 0, %s95
      %s119 = sphi 0, %s121
      %s122 = sphi 0, %s119
      %s123 = sphi 0, %s122
      %s139 = sphi 0, %s123
    $region4: #{tpu_custom_call.1} parent=1 // loop_header_branch
      %18 = sbr.rel (%p16) target = $region8
    $region5: #{tpu_custom_call.1} parent=1 // loop_body
      %s20 = ssub.s32 %s15, 1
      %s21 = ssub.s32 %s15, 2
      %s28 = sadd.s32 1, %s23
      %p29 = scmp.ge.s32.totalorder %s28, 1
      %s30 = scalar_select %p29, 0, %s28
      %s31 = sadd.s32 1, %s22
      %s32 = scalar_select %p29, %s31, %s22
      %p33 = scmp.ge.s32.totalorder %s32, 2
      %s34 = scalar_select %p33, 0, %s32
      %s35 = ssub.s32 %s22, %s34
      %p36 = scmp.eq.s32.totalorder %s35, 0
      %s38 = sadd.s32 %s37, 1
      %s39 = scalar_select %p36, %s37, %s38
      %p42 = pneg %p36
      %p43 = scmp.eq.s32.totalorder %s15, 1
      %p44 = por %p42, %p43
      %p45 = scmp.ne.s32.totalorder %s37, %s40
      %p46 = scmp.eq.s32.totalorder %s15, 0
      %p47 = por %p45, %p46
      %p48 = scmp.ne.s32.totalorder %s37, %s40
      %p49 = scmp.eq.s32.totalorder %s20, 1
      %p50 = por %p48, %p49
      %p51 = scmp.ne.s32.totalorder %s40, %s41
      %p52 = scmp.eq.s32.totalorder %s20, 0
      %p53 = por %p51, %p52
      %p54 = scmp.ne.s32.totalorder %s40, %s41
      %p55 = scmp.eq.s32.totalorder %s21, 1
      %p56 = por %p54, %p55
      %p58 = scmp.ne.s32.totalorder %s41, %s57
      %p59 = scmp.eq.s32.totalorder %s21, 0
      %p60 = por %p58, %p59
      %s61 = ssub.s32 %s22, %s34
      %s62 = ssub.s32 %s23, %s30
      %s63 = sor.u32 %s61, %s62
      %p64 = scmp.eq.s32.totalorder %s63, 0
      %s66 = sadd.s32 %s65, 1
      %s67 = scalar_select %p64, %s65, %s66
      %p70 = pneg %p64
      %p71 = scmp.eq.s32.totalorder %s15, 1
      %p72 = por %p70, %p71
      %p73 = scmp.ne.s32.totalorder %s65, %s68
      %p74 = scmp.eq.s32.totalorder %s15, 0
      %p75 = por %p73, %p74
      %p76 = scmp.ne.s32.totalorder %s65, %s68
      %p77 = scmp.eq.s32.totalorder %s20, 1
      %p78 = por %p76, %p77
      %p79 = scmp.ne.s32.totalorder %s68, %s69
      %p80 = scmp.eq.s32.totalorder %s20, 0
      %p81 = por %p79, %p80
      %p82 = scmp.ne.s32.totalorder %s68, %s69
      %p83 = scmp.eq.s32.totalorder %s21, 1
      %p84 = por %p82, %p83
      %p86 = scmp.ne.s32.totalorder %s69, %s85
      %p87 = scmp.eq.s32.totalorder %s21, 0
      %p88 = por %p86, %p87
      %s89 = ssub.s32 %s22, %s34
      %p90 = scmp.eq.s32.totalorder %s89, 0
      %s92 = sadd.s32 %s91, 1
      %s93 = scalar_select %p90, %s91, %s92
      %p96 = pneg %p90
      %p97 = scmp.eq.s32.totalorder %s15, 1
      %p98 = por %p96, %p97
      %p99 = scmp.ne.s32.totalorder %s91, %s94
      %p100 = scmp.eq.s32.totalorder %s15, 0
      %p101 = por %p99, %p100
      %p102 = scmp.ne.s32.totalorder %s91, %s94
      %p103 = scmp.eq.s32.totalorder %s20, 1
      %p104 = por %p102, %p103
      %p105 = scmp.ne.s32.totalorder %s94, %s95
      %p106 = scmp.eq.s32.totalorder %s20, 0
      %p107 = por %p105, %p106
      %p108 = scmp.ne.s32.totalorder %s94, %s95
      %p109 = scmp.eq.s32.totalorder %s21, 1
      %p110 = por %p108, %p109
      %p112 = scmp.ne.s32.totalorder %s95, %s111
      %p113 = scmp.eq.s32.totalorder %s21, 0
      %p114 = por %p112, %p113
      %s115 = ssub.s32 %s22, %s34
      %s116 = ssub.s32 %s23, %s30
      %s117 = sor.u32 %s115, %s116
      %p118 = scmp.eq.s32.totalorder %s117, 0
      %s120 = sadd.s32 %s119, 1
      %s121 = scalar_select %p118, %s119, %s120
      %p124 = pneg %p118
      %p125 = scmp.eq.s32.totalorder %s15, 1
      %p126 = por %p124, %p125
      %p127 = scmp.ne.s32.totalorder %s119, %s122
      %p128 = scmp.eq.s32.totalorder %s15, 0
      %p129 = por %p127, %p128
      %p130 = scmp.ne.s32.totalorder %s119, %s122
      %p131 = scmp.eq.s32.totalorder %s20, 1
      %p132 = por %p130, %p131
      %p133 = scmp.ne.s32.totalorder %s122, %s123
      %p134 = scmp.eq.s32.totalorder %s20, 0
      %p135 = por %p133, %p134
      %p136 = scmp.ne.s32.totalorder %s122, %s123
      %p137 = scmp.eq.s32.totalorder %s21, 1
      %p138 = por %p136, %p137
      %p140 = scmp.ne.s32.totalorder %s123, %s139
      %p141 = scmp.eq.s32.totalorder %s21, 0
      %p142 = por %p140, %p141
      %p143 = scmp.le.s32.totalorder 1, %s15
      %p144 = scmp.lt.s32.totalorder %s15, 3
      %p145 = pnand %p143, %p144
      %p146 = pneg %p145
      // Predicated region
      $region9: #{tpu_custom_call.1} parent=5 // pred_check
        _
      $region10: #{tpu_custom_call.1} parent=5 // pred_check_branch
        %148 = sbr.rel (%p145) target = $region12
      $region11: #{tpu_custom_call.1} parent=5 // pred_region
        %s149 = ssub.s32 %s15, 1
      $region12: #{tpu_custom_call.1} parent=5 // pred_fallthru
        _
      %p150 = scmp.lt.s32.totalorder %s15, 2
      // Predicated region
      $region13: #{tpu_custom_call.1} parent=5 // pred_check
        %p151 = pneg %p150
      $region14: #{tpu_custom_call.1} parent=5 // pred_check_branch
        %153 = sbr.rel (%p151) target = $region16
      $region15: #{tpu_custom_call.1} parent=5 // pred_region
        // Predicated region
        $region17: #{tpu_custom_call.1} parent=15 // pred_check
          %p154 = pneg %p47
        $region18: #{tpu_custom_call.1} parent=15 // pred_check_branch
          %156 = sbr.rel (%p154) target = $region20
        $region19: #{tpu_custom_call.1} parent=15 // pred_region
          %p157 = scmp.lt.s32.totalorder %s22, 1
          %s158 = scalar_select %p157, %s22, 1
          %s159 = smul.addr %s158, 2
          %s160 = smul.addr %s159, 8
          %s161 = scalar_lea.vmem %s0, %s160
        $region20: #{tpu_custom_call.1} parent=15 // pred_fallthru
          _
        // Predicated region
        $region21: #{tpu_custom_call.1} parent=15 // pred_check
          %p162 = pneg %p75
        $region22: #{tpu_custom_call.1} parent=15 // pred_check_branch
          %164 = sbr.rel (%p162) target = $region24
        $region23: #{tpu_custom_call.1} parent=15 // pred_region
          %s165 = sand.u32 %s65, 1
          %s166 = scalar_lea.sflag [#allocation3], %s165
          %s167 = sand.u32 %s65, 1
          %s168 = smul.addr %s167, 16
          %s169 = scalar_lea.vmem [#allocation2], %s168
          %s171 = ssub.s32 256, 256
          %172 = vsyncadd %s166, %s171
          %s173 = smul.addr %s22, 2
          %s174 = sadd.s32 %s23, %s173
          %s175 = smul.addr %s174, 128
          %s176 = scalar_lea.hbm %s1, %s175
          %s177 = sshll.u32 %s169, 4
          %s178 = int_to_ptr.vmem [resolvable:$true] %s177
          %183 = dma.hbm_to_vmem [thread:$0]  %s176, 256, %s178, %s166, 128, 128, 8
        $region24: #{tpu_custom_call.1} parent=15 // pred_fallthru
          _
        // Predicated region
        $region25: #{tpu_custom_call.1} parent=15 // pred_check
          %p184 = pneg %p101
        $region26: #{tpu_custom_call.1} parent=15 // pred_check_branch
          %186 = sbr.rel (%p184) target = $region28
        $region27: #{tpu_custom_call.1} parent=15 // pred_region
          %p187 = scmp.lt.s32.totalorder %s22, 1
          %s188 = scalar_select %p187, %s22, 1
          %s189 = smul.addr %s188, 2
          %s190 = smul.addr %s189, 8
          %s191 = scalar_lea.vmem %s2, %s190
        $region28: #{tpu_custom_call.1} parent=15 // pred_fallthru
          _
      $region16: #{tpu_custom_call.1} parent=5 // pred_fallthru
        _
      %p192 = scmp.le.s32.totalorder 1, %s15
      %p193 = scmp.lt.s32.totalorder %s15, 3
      %p194 = pnand %p192, %p193
      %p195 = pneg %p194
      // Predicated region
      $region29: #{tpu_custom_call.1} parent=5 // pred_check
        _
      $region30: #{tpu_custom_call.1} parent=5 // pred_check_branch
        %197 = sbr.rel (%p194) target = $region32
      $region31: #{tpu_custom_call.1} parent=5 // pred_region
        %s198 = ssub.s32 %s15, 1
        %s199 = sand.u32 %s68, 1
        %s200 = scalar_lea.sflag [#allocation3], %s199
        %s201 = sand.u32 %s68, 1
        %s202 = smul.addr %s201, 16
        %s203 = scalar_lea.vmem [#allocation2], %s202
        // Predicated region
        $region33: #{tpu_custom_call.1} parent=31 // pred_check
          %p204 = pneg %p81
        $region34: #{tpu_custom_call.1} parent=31 // pred_check_branch
          %206 = sbr.rel (%p204) target = $region36
        $region35: #{tpu_custom_call.1} parent=31 // pred_region
          %207 = dma.done %s200, 256
        $region36: #{tpu_custom_call.1} parent=31 // pred_fallthru
          _
        %p208 = scmp.lt.s32.totalorder %s24, 1
        %s209 = scalar_select %p208, %s24, 1
        %s210 = smul.addr %s209, 2
        %s211 = smul.addr %s210, 8
        %s212 = scalar_lea.vmem %s0, %s211
        %p213 = pneg %p53
        %p214 = pneg %p50
        %s215 = sand.u32 %s68, 1
        %s216 = scalar_lea.sflag [#allocation3], %s215
        %s217 = sand.u32 %s68, 1
        %s218 = smul.addr %s217, 16
        %s219 = scalar_lea.vmem [#allocation2], %s218
        %p220 = pneg %p81
        %p221 = pneg %p78
        %p222 = scmp.lt.s32.totalorder %s24, 1
        %s223 = scalar_select %p222, %s24, 1
        %s224 = smul.addr %s223, 2
        %s225 = smul.addr %s224, 8
        %s226 = scalar_lea.vmem %s2, %s225
        %p227 = pneg %p107
        %p228 = pneg %p104
        %p229 = pneg %p135
        %p230 = pneg %p132
        %s231 = sand.u32 %s122, 1
        %s232 = scalar_lea.sflag [#allocation4], %s231
        %s233 = sand.u32 %s122, 1
        %s234 = smul.addr %s233, 16
        %s235 = scalar_lea.vmem [#allocation5], %s234
        %p236 = scmp.lt.s32.totalorder %s24, 1
        %s237 = scalar_select %p236, %s24, 1
        %s238 = smul.addr %s237, 2
        %s239 = smul.addr %s238, 8
        %s240 = scalar_lea.vmem %s0, %s239
        %p241 = scmp.lt.s32.totalorder %s24, 1
        %s242 = scalar_select %p241, %s24, 1
        %s243 = smul.addr %s242, 2
        %s244 = smul.addr %s243, 8
        %s245 = scalar_lea.vmem %s2, %s244
        %v246 = vld [vmem:[%s240] sm:$0xff]
        %v247 = vld [vmem:[%s240 + $0x8] sm:$0xff]
        %v248 = vld [vmem:[%s203] sm:$0xff]
        %v249 = vld [vmem:[%s203 + $0x8] sm:$0xff]
        %250 = vxpose.xlu0.b32.start [1/16] %v246, 128
        %251 = vxpose.xlu0.b32.cont [2/16] %v247, 128
        %252 = vxpose.xlu0.b32.cont [3/16] 0.0, 128
        %253 = vxpose.xlu0.b32.cont [4/16] 0.0, 128
        %254 = vxpose.xlu0.b32.cont [5/16] 0.0, 128
        %255 = vxpose.xlu0.b32.cont [6/16] 0.0, 128
        %256 = vxpose.xlu0.b32.cont [7/16] 0.0, 128
        %257 = vxpose.xlu0.b32.cont [8/16] 0.0, 128
        %258 = vxpose.xlu0.b32.cont [9/16] 0.0, 128
        %259 = vxpose.xlu0.b32.cont [10/16] 0.0, 128
        %260 = vxpose.xlu0.b32.cont [11/16] 0.0, 128
        %261 = vxpose.xlu0.b32.cont [12/16] 0.0, 128
        %262 = vxpose.xlu0.b32.cont [13/16] 0.0, 128
        %263 = vxpose.xlu0.b32.cont [14/16] 0.0, 128
        %264 = vxpose.xlu0.b32.cont [15/16] 0.0, 128
        %265 = vxpose.xlu0.b32.end [16/16] 0.0, 128
        %v266 = vpop.trf.xlu0
        %v267 = vpop.trf.xlu0
        %v268 = vpop.trf.xlu0
        %v269 = vpop.trf.xlu0
        %v270 = vpop.trf.xlu0
        %v271 = vpop.trf.xlu0
        %v272 = vpop.trf.xlu0
        %v273 = vpop.trf.xlu0
        %v274 = vpop.trf.xlu0
        %v275 = vpop.trf.xlu0
        %v276 = vpop.trf.xlu0
        %v277 = vpop.trf.xlu0
        %v278 = vpop.trf.xlu0
        %v279 = vpop.trf.xlu0
        %v280 = vpop.trf.xlu0
        %v281 = vpop.trf.xlu0
        %vm282 = vcmask 130048
        %v284 = vsel %vm282, %v266, 0
        %v287 = vsel %vm282, %v267, 0
        %289 = vmatprep.subr.mxu0 0.0
        %290 = vmatpush1.msra.mxu0 0.0
        %291 = vmatprep.subr.mxu0 0.0
        %292 = vmatpush1.msra.mxu0 0.0
        %293 = vmatprep.subr.mxu0 0.0
        %294 = vmatpush1.msra.mxu0 0.0
        %295 = vmatprep.subr.mxu0 0.0
        %296 = vmatpush1.msra.mxu0 0.0
        %297 = vmatprep.subr.mxu0 0.0
        %298 = vmatpush1.msra.mxu0 0.0
        %299 = vmatprep.subr.mxu0 0.0
        %300 = vmatpush1.msra.mxu0 0.0
        %301 = vmatprep.subr.mxu0 0.0
        %302 = vmatpush1.msra.mxu0 0.0
        %303 = vmatprep.subr.mxu0 0.0
        %304 = vmatpush1.msra.mxu0 0.0
        %305 = vmatprep.subr.mxu0 0.0
        %306 = vmatpush1.msra.mxu0 0.0
        %307 = vmatprep.subr.mxu0 0.0
        %308 = vmatpush1.msra.mxu0 0.0
        %309 = vmatprep.subr.mxu0 0.0
        %310 = vmatpush1.msra.mxu0 0.0
        %311 = vmatprep.subr.mxu0 0.0
        %312 = vmatpush1.msra.mxu0 0.0
        %313 = vmatprep.subr.mxu0 0.0
        %314 = vmatpush1.msra.mxu0 0.0
        %315 = vmatprep.subr.mxu0 0.0
        %316 = vmatpush1.msra.mxu0 0.0
        %317 = vmatprep.subr.mxu0 0.0
        %318 = vmatpush1.msra.mxu0 %v249
        %319 = vmatprep.subr.mxu0 0.0
        %320 = vmatpush1.msra.mxu0 %v248
        %321 = vmatprep.subr.mxu0 0.0
        %322 = vmatpush2.msra.mxu0 0.0
        %323 = vmatprep.subr.mxu0 0.0
        %324 = vmatpush2.msra.mxu0 0.0
        %325 = vmatprep.subr.mxu0 0.0
        %326 = vmatpush2.msra.mxu0 0.0
        %327 = vmatprep.subr.mxu0 0.0
        %328 = vmatpush2.msra.mxu0 0.0
        %329 = vmatprep.subr.mxu0 0.0
        %330 = vmatpush2.msra.mxu0 0.0
        %331 = vmatprep.subr.mxu0 0.0
        %332 = vmatpush2.msra.mxu0 0.0
        %333 = vmatprep.subr.mxu0 0.0
        %334 = vmatpush2.msra.mxu0 0.0
        %335 = vmatprep.subr.mxu0 0.0
        %336 = vmatpush2.msra.mxu0 0.0
        %337 = vmatprep.subr.mxu0 0.0
        %338 = vmatpush2.msra.mxu0 0.0
        %339 = vmatprep.subr.mxu0 0.0
        %340 = vmatpush2.msra.mxu0 0.0
        %341 = vmatprep.subr.mxu0 0.0
        %342 = vmatpush2.msra.mxu0 0.0
        %343 = vmatprep.subr.mxu0 0.0
        %344 = vmatpush2.msra.mxu0 0.0
        %345 = vmatprep.subr.mxu0 0.0
        %346 = vmatpush2.msra.mxu0 0.0
        %347 = vmatprep.subr.mxu0 0.0
        %348 = vmatpush2.msra.mxu0 0.0
        %349 = vmatprep.subr.mxu0 0.0
        %350 = vmatpush2.msra.mxu0 0.0
        %351 = vmatprep.subr.mxu0 0.0
        %352 = vmatpush2.msra.mxu0 0.0
        %353 = vmatprep.mubr.f32.mxu0 0.0
        %354 = vmatmul.mubr.f32.gmra.mxu0 %v284
        %v355 = vpop.f32.mrf.mxu0
        %v356 = vadd.f32 0.0, %v355
        %v357 = vpop.f32.mrf.mxu0
        %358 = vmatprep.mubr.f32.mxu0 0.0
        %359 = vmatmul.mubr.f32.gmra.mxu0 %v287
        %v360 = vpop.f32.mrf.mxu0
        %v361 = vadd.f32 0.0, %v360
        %v362 = vpop.f32.mrf.mxu0
        %363 = vdwg.mxu0
        %v364 = vld [vmem:[%s245] sm:$0xff]
        %v365 = vld [vmem:[%s245 + $0x8] sm:$0xff]
        %367 = vset.pattern.permute.xlu0 0
        %368 = vperm.xlu0 %367, %v364
        %v369 = vpop.permute.xlu0 %368
        %372 = vset.pattern.permute.xlu0 0
        %373 = vperm.xlu0 %372, %v365
        %v374 = vpop.permute.xlu0 %373
        %v376 = vmul.f32 %v356, %v369
        %v377 = vmul.f32 %v361, %v374
        %378 = vst [vmem:[%s235] sm:$0xff] %v376
        %379 = vst [vmem:[%s235 + $0x8] sm:$0xff] %v377
        %s380 = sand.u32 %s122, 1
        %s381 = scalar_lea.sflag [#allocation4], %s380
        %s382 = sand.u32 %s122, 1
        %s383 = smul.addr %s382, 16
        %s384 = scalar_lea.vmem [#allocation5], %s383
        // Predicated region
        $region37: #{tpu_custom_call.1} parent=31 // pred_check
          %p385 = pneg %p132
        $region38: #{tpu_custom_call.1} parent=31 // pred_check_branch
          %387 = sbr.rel (%p385) target = $region40
        $region39: #{tpu_custom_call.1} parent=31 // pred_region
          %s389 = ssub.s32 256, 256
          %390 = vsyncadd %s381, %s389
          %s391 = smul.addr %s24, 2
          %s392 = sadd.s32 %s25, %s391
          %s393 = smul.addr %s392, 128
          %s394 = scalar_lea.hbm %s3, %s393
          %s395 = sshll.u32 %s384, 4
          %s396 = int_to_ptr.vmem [resolvable:$true] %s395
          %401 = dma.vmem_to_hbm [thread:$0]  %s396, 256, %s394, %s381, 128, 128, 8
        $region40: #{tpu_custom_call.1} parent=31 // pred_fallthru
          _
      $region32: #{tpu_custom_call.1} parent=5 // pred_fallthru
        _
      %p402 = scmp.le.s32.totalorder 2, %s15
      // Predicated region
      $region41: #{tpu_custom_call.1} parent=5 // pred_check
        %p403 = pneg %p402
      $region42: #{tpu_custom_call.1} parent=5 // pred_check_branch
        %405 = sbr.rel (%p403) target = $region44
      $region43: #{tpu_custom_call.1} parent=5 // pred_region
        %s406 = ssub.s32 %s15, 2
        // Predicated region
        $region45: #{tpu_custom_call.1} parent=43 // pred_check
          %p407 = pneg %p138
        $region46: #{tpu_custom_call.1} parent=43 // pred_check_branch
          %409 = sbr.rel (%p407) target = $region48
        $region47: #{tpu_custom_call.1} parent=43 // pred_region
          %s410 = sand.u32 %s123, 1
          %s411 = scalar_lea.sflag [#allocation4], %s410
          %s412 = sand.u32 %s123, 1
          %s413 = smul.addr %s412, 16
          %s414 = scalar_lea.vmem [#allocation5], %s413
          %415 = dma.done %s411, 256
        $region48: #{tpu_custom_call.1} parent=43 // pred_fallthru
          _
      $region44: #{tpu_custom_call.1} parent=5 // pred_fallthru
        _
    $region6: #{tpu_custom_call.1} parent=1 // loop_footer
      %s19 = sadd.s32 1, %s15
    $region7: #{tpu_custom_call.1} parent=1 // loop_footer_branch
      %14 = sbr.rel target = $region3
    $region8: #{tpu_custom_call.1} parent=1 // loop_exit
      _
    %416 = vsyncpa [#allocation3], 1
    %s417 = scalar_lea.sflag [#allocation3], 1
    %418 = vsyncpa %s417, 1
    %419 = vsyncpa [#allocation4], 1
    %s420 = scalar_lea.sflag [#allocation4], 1
    %421 = vsyncpa %s420, 1

</llo_original>
